<compile_context>
chip_gen: v5e
topology: v5e:2x2
jax: 0.10.0
libtpu: 0.0.40
codegen_flags: <defaults>
</compile_context>

<pallas_src>
import jax
import jax.numpy as jnp
from jax.experimental import pallas as pl
from jax.experimental.pallas import tpu as pltpu


def _aff_tile(x, y, w1x, w1y, b1, w2, b2):
    """AFF math on one (C, T) tile: spatial on lanes, channels on sublanes."""
    # 1x1 conv (2C -> inter) on concat([x, y]) == W1x @ x + W1y @ y (BN1 folded).
    z1 = (jnp.dot(w1x, x, preferred_element_type=jnp.float32)
          + jnp.dot(w1y, y, preferred_element_type=jnp.float32)
          + b1)                                       # (inter, T)
    h = z1 * jax.nn.sigmoid(z1)                       # SiLU (EUP sigmoid)
    # 1x1 conv (inter -> C), BN2 folded in.
    z2 = jnp.dot(w2, h, preferred_element_type=jnp.float32) + b2   # (C, T)
    att = 1.0 + jnp.tanh(z2)
    # x*att + y*(2-att) == 2*y + (x - y)*att  (fewer live (C,T) temporaries)
    return 2.0 * y + (x - y) * att


def _make_kernel(nb):
    """nb == 1: squeezed (C, T) blocks.  nb > 1: (nb, C, T) blocks, static unroll."""
    if nb == 1:
        def kernel(x_ref, y_ref, w1x_ref, w1y_ref, b1_ref, w2_ref, b2_ref, o_ref):
            o_ref[...] = _aff_tile(
                x_ref[...], y_ref[...], w1x_ref[...], w1y_ref[...],
                b1_ref[...], w2_ref[...], b2_ref[...]).astype(o_ref.dtype)
    else:
        def kernel(x_ref, y_ref, w1x_ref, w1y_ref, b1_ref, w2_ref, b2_ref, o_ref):
            w1x = w1x_ref[...]
            w1y = w1y_ref[...]
            b1 = b1_ref[...]
            w2 = w2_ref[...]
            b2 = b2_ref[...]
            for n in range(nb):        # static unroll over folded batch elements
                o_ref[n] = _aff_tile(x_ref[n], y_ref[n],
                                     w1x, w1y, b1, w2, b2).astype(o_ref.dtype)
    return kernel


def _choose_tiling(N, HW, tile_hw):
    """Pick (batch-fold nb, lane tile t)."""
    # Lane tile must be a multiple of 128 (round any user-supplied value down).
    t_cap = max(128, (int(tile_hw) // 128) * 128)
    if HW <= t_cap:
        # Full-extent lane block: exempt from the 128 rule -> no masked edge block.
        t = HW
        # Fold batch elements so each grid step moves ~t_cap lanes of payload,
        # amortizing the fixed per-grid-step overhead for small feature maps.
        nb = max(1, min(N, t_cap // max(HW, 1)))
        while N % nb != 0:             # keep batch blocks unragged
            nb -= 1
    else:
        t = t_cap                      # ragged tail handled by Pallas edge-block masking
        nb = 1
    return nb, t


def aff_forward(x, ds_y, params, *, tile_hw=8192):
    """x, ds_y: NCHW float32 arrays of identical shape (N, C, H, W)."""
    N, C, H, W = x.shape
    HW = H * W
    inter = params["w1"].shape[0]

    # ---- fold BatchNorm (inference mode) into the 1x1 convs (param algebra) ----
    eps = 1e-5
    s1 = params["bn1_gamma"] / jnp.sqrt(params["bn1_var"] + eps)          # (inter,)
    s2 = params["bn2_gamma"] / jnp.sqrt(params["bn2_var"] + eps)          # (C,)

    w1 = params["w1"].reshape(inter, 2 * C) * s1[:, None]                 # (inter, 2C)
    b1 = (params["b1"] - params["bn1_mean"]) * s1 + params["bn1_beta"]    # (inter,)
    w1x = w1[:, :C].astype(jnp.float32)                                   # (inter, C)
    w1y = w1[:, C:].astype(jnp.float32)                                   # (inter, C)

    w2 = (params["w2"].reshape(C, inter) * s2[:, None]).astype(jnp.float32)  # (C, inter)
    b2 = (params["b2"] - params["bn2_mean"]) * s2 + params["bn2_beta"]    # (C,)

    b1 = b1.reshape(inter, 1).astype(jnp.float32)
    b2 = b2.reshape(C, 1).astype(jnp.float32)

    # ---- keep NCHW: view as (N, C, H*W); spatial on lanes, no transposes ----
    x3 = x.reshape(N, C, HW)
    y3 = ds_y.reshape(N, C, HW)

    nb, t = _choose_tiling(N, HW, tile_hw)
    grid = (N // nb, pl.cdiv(HW, t))

    if nb == 1:
        row_spec = pl.BlockSpec((None, C, t), lambda n, s: (n, 0, s))
    else:
        row_spec = pl.BlockSpec((nb, C, t), lambda n, s: (n, 0, s))
    full = lambda a: pl.BlockSpec(a.shape, lambda n, s: (0, 0))

    out = pl.pallas_call(
        _make_kernel(nb),
        out_shape=jax.ShapeDtypeStruct((N, C, HW), x.dtype),
        grid_spec=pltpu.PrefetchScalarGridSpec(
            num_scalar_prefetch=0,
            grid=grid,
            in_specs=[
                row_spec,          # x
                row_spec,          # ds_y
                full(w1x),         # (inter, C)
                full(w1y),         # (inter, C)
                full(b1),          # (inter, 1)
                full(w2),          # (C, inter)
                full(b2),          # (C, 1)
            ],
            out_specs=row_spec,
        ),
        compiler_params=pltpu.CompilerParams(
            dimension_semantics=("parallel", "parallel"),
            # Big lane tiles need more than the default scoped VMEM on v5e/v6e;
            # 48 MiB also stays inside v7x's 64 MiB physical VMEM.
            vmem_limit_bytes=48 * 1024 * 1024,
        ),
    )(x3, y3, w1x, w1y, b1, w2, b2)

    return out.reshape(N, C, H, W)


def init_params(key, channels=64, r=4):
    inter = channels // r
    ks = jax.random.split(key, 4)
    return {
        "w1": 0.05 * jax.random.normal(ks[0], (inter, 2 * channels, 1, 1), jnp.float32),
        "b1": 0.01 * jax.random.normal(ks[1], (inter,), jnp.float32),
        "w2": 0.05 * jax.random.normal(ks[2], (channels, inter, 1, 1), jnp.float32),
        "b2": 0.01 * jax.random.normal(ks[3], (channels,), jnp.float32),
        # BatchNorm (inference-mode) parameters, deterministic but non-trivial.
        "bn1_gamma": 1.0 + 0.1 * jnp.sin(jnp.arange(inter, dtype=jnp.float32)),
        "bn1_beta": 0.05 * jnp.cos(jnp.arange(inter, dtype=jnp.float32)),
        "bn1_mean": 0.02 * jnp.arange(inter, dtype=jnp.float32),
        "bn1_var": 1.0 + 0.01 * jnp.arange(inter, dtype=jnp.float32),
        "bn2_gamma": 1.0 + 0.1 * jnp.cos(jnp.arange(channels, dtype=jnp.float32)),
        "bn2_beta": 0.05 * jnp.sin(jnp.arange(channels, dtype=jnp.float32)),
        "bn2_mean": 0.01 * jnp.arange(channels, dtype=jnp.float32),
        "bn2_var": 1.0 + 0.005 * jnp.arange(channels, dtype=jnp.float32),
    }


def aff_reference(x, ds_y, params):
    """Pure-JAX NCHW reference (inference-mode BN), for a sanity check."""
    C = x.shape[1]
    inter = params["w1"].shape[0]
    eps = 1e-5
    bc = lambda v: v[None, :, None, None]

    xa = jnp.concatenate([x, ds_y], axis=1)                              # (N, 2C, H, W)
    z1 = jnp.einsum("oc,nchw->nohw", params["w1"].reshape(inter, 2 * C), xa) \
        + bc(params["b1"])
    z1 = (z1 - bc(params["bn1_mean"])) / jnp.sqrt(bc(params["bn1_var"]) + eps) \
        * bc(params["bn1_gamma"]) + bc(params["bn1_beta"])
    h = z1 * jax.nn.sigmoid(z1)
    z2 = jnp.einsum("oc,nchw->nohw", params["w2"].reshape(C, inter), h) \
        + bc(params["b2"])
    z2 = (z2 - bc(params["bn2_mean"])) / jnp.sqrt(bc(params["bn2_var"]) + eps) \
        * bc(params["bn2_gamma"]) + bc(params["bn2_beta"])
    att = 1.0 + jnp.tanh(z2)
    return x * att + ds_y * (2.0 - att)


if __name__ == "__main__":
    channels, r = 64, 4
    key = jax.random.PRNGKey(0)
    k_x, k_y, k_p = jax.random.split(key, 3)
    params = init_params(k_p, channels=channels, r=r)

    # Case 1: tiny spatial (HW=64)  -> batch-folded full-extent block, single grid step.
    # Case 2: HW=144                -> one unmasked full-extent block (no 128-edge split).
    # Case 3: HW=400, tile_hw=300   -> tile rounded down to 256, ragged masked edge block.
    cases = [
        (2, 8, 8, 8192),
        (2, 12, 12, 8192),
        (1, 20, 20, 300),
    ]
    for (N, H, W, thw) in cases:
        x = jax.random.normal(k_x, (N, channels, H, W), jnp.float32)
        ds_y = jax.random.normal(k_y, (N, channels, H, W), jnp.float32)

        out = jax.block_until_ready(aff_forward(x, ds_y, params, tile_hw=thw))
        ref = aff_reference(x, ds_y, params)

        assert out.shape == (N, channels, H, W)
        assert jnp.max(jnp.abs(out - ref)) < 1e-4, "mismatch vs. reference"

    print("KERNEL_OK")
</pallas_src>

<mosaic_0001>
module attributes {stable_mosaic.version = 11 : i64} {
  func.func @kernel(%arg0: i32, %arg1: i32, %arg2: memref<2x64x64xf32, #tpu.memory_space<vmem>>, %arg3: memref<2x64x64xf32, #tpu.memory_space<vmem>>, %arg4: memref<16x64xf32, #tpu.memory_space<vmem>>, %arg5: memref<16x64xf32, #tpu.memory_space<vmem>>, %arg6: memref<16x1xf32, #tpu.memory_space<vmem>>, %arg7: memref<64x16xf32, #tpu.memory_space<vmem>>, %arg8: memref<64x1xf32, #tpu.memory_space<vmem>>, %arg9: memref<2x64x64xf32, #tpu.memory_space<vmem>>) attributes {dimension_semantics = [#tpu.dimension_semantics<parallel>, #tpu.dimension_semantics<parallel>], iteration_bounds = array<i64: 1, 1>, scalar_prefetch = 0 : i64, scratch_operands = 0 : i64, tpu.core_type = #tpu.core_type<tc>, window_params = [{transform_indices = @transform_0, window_bounds = array<i64: 2, 64, 64>}, {transform_indices = @transform_1, window_bounds = array<i64: 2, 64, 64>}, {pipeline_mode = #tpu.pipeline_mode<synchronous>, transform_indices = @transform_2, window_bounds = array<i64: 16, 64>}, {pipeline_mode = #tpu.pipeline_mode<synchronous>, transform_indices = @transform_3, window_bounds = array<i64: 16, 64>}, {pipeline_mode = #tpu.pipeline_mode<synchronous>, transform_indices = @transform_4, window_bounds = array<i64: 16, 1>}, {pipeline_mode = #tpu.pipeline_mode<synchronous>, transform_indices = @transform_5, window_bounds = array<i64: 64, 16>}, {pipeline_mode = #tpu.pipeline_mode<synchronous>, transform_indices = @transform_6, window_bounds = array<i64: 64, 1>}, {transform_indices = @transform_7, window_bounds = array<i64: 2, 64, 64>}]} {
    %c0 = arith.constant 0 : index
    %c0_0 = arith.constant 0 : index
    %0 = vector.load %arg4[%c0, %c0_0] : memref<16x64xf32, #tpu.memory_space<vmem>>, vector<16x64xf32>
    %c0_1 = arith.constant 0 : index
    %c0_2 = arith.constant 0 : index
    %1 = vector.load %arg5[%c0_1, %c0_2] : memref<16x64xf32, #tpu.memory_space<vmem>>, vector<16x64xf32>
    %c0_3 = arith.constant 0 : index
    %c0_4 = arith.constant 0 : index
    %2 = vector.load %arg6[%c0_3, %c0_4] : memref<16x1xf32, #tpu.memory_space<vmem>>, vector<16x1xf32>
    %c0_5 = arith.constant 0 : index
    %c0_6 = arith.constant 0 : index
    %3 = vector.load %arg7[%c0_5, %c0_6] : memref<64x16xf32, #tpu.memory_space<vmem>>, vector<64x16xf32>
    %c0_7 = arith.constant 0 : index
    %c0_8 = arith.constant 0 : index
    %4 = vector.load %arg8[%c0_7, %c0_8] : memref<64x1xf32, #tpu.memory_space<vmem>>, vector<64x1xf32>
    %c0_9 = arith.constant 0 : index
    %c0_10 = arith.constant 0 : index
    %c0_11 = arith.constant 0 : index
    %5 = vector.load %arg2[%c0_9, %c0_10, %c0_11] : memref<2x64x64xf32, #tpu.memory_space<vmem>>, vector<1x64x64xf32>
    %6 = vector.shape_cast %5 : vector<1x64x64xf32> to vector<64x64xf32>
    %c0_12 = arith.constant 0 : index
    %c0_13 = arith.constant 0 : index
    %c0_14 = arith.constant 0 : index
    %7 = vector.load %arg3[%c0_12, %c0_13, %c0_14] : memref<2x64x64xf32, #tpu.memory_space<vmem>>, vector<1x64x64xf32>
    %8 = vector.shape_cast %7 : vector<1x64x64xf32> to vector<64x64xf32>
    %cst = arith.constant dense<0.000000e+00> : vector<16x64xf32>
    %9 = tpu.matmul %0, %6, %cst {dimension_numbers = #tpu.dot_dimension_numbers<[1], [0], [0], [1], [0, 0, 1, 1], [], []>} : vector<16x64xf32>, vector<64x64xf32>, vector<16x64xf32> -> vector<16x64xf32>
    %cst_15 = arith.constant dense<0.000000e+00> : vector<16x64xf32>
    %10 = tpu.matmul %1, %8, %cst_15 {dimension_numbers = #tpu.dot_dimension_numbers<[1], [0], [0], [1], [0, 0, 1, 1], [], []>} : vector<16x64xf32>, vector<64x64xf32>, vector<16x64xf32> -> vector<16x64xf32>
    %11 = arith.addf %9, %10 : vector<16x64xf32>
    %12 = vector.broadcast %2 : vector<16x1xf32> to vector<16x64xf32>
    %13 = arith.addf %11, %12 : vector<16x64xf32>
    %14 = arith.negf %13 : vector<16x64xf32>
    %15 = math.exp %14 : vector<16x64xf32>
    %cst_16 = arith.constant 1.000000e+00 : f32
    %16 = vector.broadcast %cst_16 : f32 to vector<16x64xf32>
    %17 = arith.addf %16, %15 : vector<16x64xf32>
    %18 = arith.divf %16, %17 : vector<16x64xf32>
    %19 = arith.mulf %13, %18 : vector<16x64xf32>
    %cst_17 = arith.constant dense<0.000000e+00> : vector<64x64xf32>
    %20 = tpu.matmul %3, %19, %cst_17 {dimension_numbers = #tpu.dot_dimension_numbers<[1], [0], [0], [1], [0, 0, 1, 1], [], []>} : vector<64x16xf32>, vector<16x64xf32>, vector<64x64xf32> -> vector<64x64xf32>
    %21 = vector.broadcast %4 : vector<64x1xf32> to vector<64x64xf32>
    %22 = arith.addf %20, %21 : vector<64x64xf32>
    %23 = math.tanh %22 : vector<64x64xf32>
    %cst_18 = arith.constant 1.000000e+00 : f32
    %24 = vector.broadcast %cst_18 : f32 to vector<64x64xf32>
    %25 = arith.addf %24, %23 : vector<64x64xf32>
    %cst_19 = arith.constant 2.000000e+00 : f32
    %26 = vector.broadcast %cst_19 : f32 to vector<64x64xf32>
    %27 = arith.mulf %26, %8 : vector<64x64xf32>
    %28 = arith.subf %6, %8 : vector<64x64xf32>
    %29 = arith.mulf %28, %25 : vector<64x64xf32>
    %30 = arith.addf %27, %29 : vector<64x64xf32>
    %c0_20 = arith.constant 0 : index
    %c0_21 = arith.constant 0 : index
    %c0_22 = arith.constant 0 : index
    %31 = vector.load %arg9[%c0_20, %c0_21, %c0_22] : memref<2x64x64xf32, #tpu.memory_space<vmem>>, vector<1x64x64xf32>
    %32 = vector.shape_cast %31 : vector<1x64x64xf32> to vector<64x64xf32>
    %33 = vector.shape_cast %30 : vector<64x64xf32> to vector<1x64x64xf32>
    tpu.vector_store %arg9[%c0_20, %c0_21, %c0_22], %33 {strides = array<i32>} : memref<2x64x64xf32, #tpu.memory_space<vmem>>, vector<1x64x64xf32>,
    %c1 = arith.constant 1 : index
    %c0_23 = arith.constant 0 : index
    %c0_24 = arith.constant 0 : index
    %34 = vector.load %arg2[%c1, %c0_23, %c0_24] : memref<2x64x64xf32, #tpu.memory_space<vmem>>, vector<1x64x64xf32>
    %35 = vector.shape_cast %34 : vector<1x64x64xf32> to vector<64x64xf32>
    %c1_25 = arith.constant 1 : index
    %c0_26 = arith.constant 0 : index
    %c0_27 = arith.constant 0 : index
    %36 = vector.load %arg3[%c1_25, %c0_26, %c0_27] : memref<2x64x64xf32, #tpu.memory_space<vmem>>, vector<1x64x64xf32>
    %37 = vector.shape_cast %36 : vector<1x64x64xf32> to vector<64x64xf32>
    %cst_28 = arith.constant dense<0.000000e+00> : vector<16x64xf32>
    %38 = tpu.matmul %0, %35, %cst_28 {dimension_numbers = #tpu.dot_dimension_numbers<[1], [0], [0], [1], [0, 0, 1, 1], [], []>} : vector<16x64xf32>, vector<64x64xf32>, vector<16x64xf32> -> vector<16x64xf32>
    %cst_29 = arith.constant dense<0.000000e+00> : vector<16x64xf32>
    %39 = tpu.matmul %1, %37, %cst_29 {dimension_numbers = #tpu.dot_dimension_numbers<[1], [0], [0], [1], [0, 0, 1, 1], [], []>} : vector<16x64xf32>, vector<64x64xf32>, vector<16x64xf32> -> vector<16x64xf32>
    %40 = arith.addf %38, %39 : vector<16x64xf32>
    %41 = vector.broadcast %2 : vector<16x1xf32> to vector<16x64xf32>
    %42 = arith.addf %40, %41 : vector<16x64xf32>
    %43 = arith.negf %42 : vector<16x64xf32>
    %44 = math.exp %43 : vector<16x64xf32>
    %cst_30 = arith.constant 1.000000e+00 : f32
    %45 = vector.broadcast %cst_30 : f32 to vector<16x64xf32>
    %46 = arith.addf %45, %44 : vector<16x64xf32>
    %47 = arith.divf %45, %46 : vector<16x64xf32>
    %48 = arith.mulf %42, %47 : vector<16x64xf32>
    %cst_31 = arith.constant dense<0.000000e+00> : vector<64x64xf32>
    %49 = tpu.matmul %3, %48, %cst_31 {dimension_numbers = #tpu.dot_dimension_numbers<[1], [0], [0], [1], [0, 0, 1, 1], [], []>} : vector<64x16xf32>, vector<16x64xf32>, vector<64x64xf32> -> vector<64x64xf32>
    %50 = vector.broadcast %4 : vector<64x1xf32> to vector<64x64xf32>
    %51 = arith.addf %49, %50 : vector<64x64xf32>
    %52 = math.tanh %51 : vector<64x64xf32>
    %cst_32 = arith.constant 1.000000e+00 : f32
    %53 = vector.broadcast %cst_32 : f32 to vector<64x64xf32>
    %54 = arith.addf %53, %52 : vector<64x64xf32>
    %cst_33 = arith.constant 2.000000e+00 : f32
    %55 = vector.broadcast %cst_33 : f32 to vector<64x64xf32>
    %56 = arith.mulf %55, %37 : vector<64x64xf32>
    %57 = arith.subf %35, %37 : vector<64x64xf32>
    %58 = arith.mulf %57, %54 : vector<64x64xf32>
    %59 = arith.addf %56, %58 : vector<64x64xf32>
    %c1_34 = arith.constant 1 : index
    %c0_35 = arith.constant 0 : index
    %c0_36 = arith.constant 0 : index
    %60 = vector.load %arg9[%c1_34, %c0_35, %c0_36] : memref<2x64x64xf32, #tpu.memory_space<vmem>>, vector<1x64x64xf32>
    %61 = vector.shape_cast %60 : vector<1x64x64xf32> to vector<64x64xf32>
    %62 = vector.shape_cast %59 : vector<64x64xf32> to vector<1x64x64xf32>
    tpu.vector_store %arg9[%c1_34, %c0_35, %c0_36], %62 {strides = array<i32>} : memref<2x64x64xf32, #tpu.memory_space<vmem>>, vector<1x64x64xf32>,
    return
  }
  func.func @transform_0(%arg0: i32, %arg1: i32) -> (i32, i32, i32) {
    %c0_i32 = arith.constant 0 : i32
    %c0_i32_0 = arith.constant 0 : i32
    return %arg0, %c0_i32, %arg1 : i32, i32, i32
  }
  func.func @transform_1(%arg0: i32, %arg1: i32) -> (i32, i32, i32) {
    %c0_i32 = arith.constant 0 : i32
    %c0_i32_0 = arith.constant 0 : i32
    return %arg0, %c0_i32, %arg1 : i32, i32, i32
  }
  func.func @transform_2(%arg0: i32, %arg1: i32) -> (i32, i32) {
    %c0_i32 = arith.constant 0 : i32
    %c0_i32_0 = arith.constant 0 : i32
    %c0_i32_1 = arith.constant 0 : i32
    return %c0_i32, %c0_i32_0 : i32, i32
  }
  func.func @transform_3(%arg0: i32, %arg1: i32) -> (i32, i32) {
    %c0_i32 = arith.constant 0 : i32
    %c0_i32_0 = arith.constant 0 : i32
    %c0_i32_1 = arith.constant 0 : i32
    return %c0_i32, %c0_i32_0 : i32, i32
  }
  func.func @transform_4(%arg0: i32, %arg1: i32) -> (i32, i32) {
    %c0_i32 = arith.constant 0 : i32
    %c0_i32_0 = arith.constant 0 : i32
    %c0_i32_1 = arith.constant 0 : i32
    return %c0_i32, %c0_i32_0 : i32, i32
  }
  func.func @transform_5(%arg0: i32, %arg1: i32) -> (i32, i32) {
    %c0_i32 = arith.constant 0 : i32
    %c0_i32_0 = arith.constant 0 : i32
    %c0_i32_1 = arith.constant 0 : i32
    return %c0_i32, %c0_i32_0 : i32, i32
  }
  func.func @transform_6(%arg0: i32, %arg1: i32) -> (i32, i32) {
    %c0_i32 = arith.constant 0 : i32
    %c0_i32_0 = arith.constant 0 : i32
    %c0_i32_1 = arith.constant 0 : i32
    return %c0_i32, %c0_i32_0 : i32, i32
  }
  func.func @transform_7(%arg0: i32, %arg1: i32) -> (i32, i32, i32) {
    %c0_i32 = arith.constant 0 : i32
    %c0_i32_0 = arith.constant 0 : i32
    return %arg0, %c0_i32, %arg1 : i32, i32, i32
  }
}

</mosaic_0001>

<llo_original>
// kernel: tpu_custom_call.1
$region0: #{tpu_custom_call.1}
  #allocation0 [shape = 'u32[]', space=smem, size = 0x4, offset = 0x4, fixed_abs, tag = 'smem constant byte address 0x4 - core index']
  #allocation1 [shape = 'u32[72,128]{1,0:T(1,128)}', space=vmem, size = 0x9000, scoped, tag = 'internal scratch']
  %s0 = inlined_call_operand.vmem [shape: f32[2,64,64], index: 0, kind: input, shape index: {}]
  %s1 = inlined_call_operand.hbm [shape: f32[2,64,64], index: 1, kind: input, shape index: {}]
  %s2 = inlined_call_operand.vmem [shape: f32[16,64], index: 2, kind: input, shape index: {}]
  %s3 = inlined_call_operand.hbm [shape: f32[16,64], index: 3, kind: input, shape index: {}]
  %s4 = inlined_call_operand.vmem [shape: f32[16,1], index: 4, kind: input, shape index: {}]
  %s5 = inlined_call_operand.vmem [shape: f32[64,16], index: 5, kind: input, shape index: {}]
  %s6 = inlined_call_operand.vmem [shape: f32[64,1], index: 6, kind: input, shape index: {}]
  %s7 = inlined_call_operand.hbm [shape: f32[2,64,64], index: 7, kind: output, shape index: {}]
  %s8 = sld [smem:[#allocation0]]
  $region46: #{tpu_custom_call.1} parent=0
    _
  %s10 = ssub.s32 1, %s8
  %s11 = scalar_select 0, %s10, %s8
  $region1: #{tpu_custom_call.1} parent=0
    #allocation2 [shape = 'u8[65536]{0}', space=vmem, size = 0x10000, scoped, tag = 'input window, operand 1, single buffered']
    #allocation3 [shape = 's32[1]{0}', space=sflag, size = 0x4, scoped, tag = 'scoped memory for tpu_custom_call.1']
    #allocation4 [shape = 's32[1]{0}', space=sflag, size = 0x4, scoped, tag = 'scoped memory for tpu_custom_call.1']
    #allocation5 [shape = 'u8[8192]{0}', space=vmem, size = 0x2000, scoped, tag = 'input window, operand 3, single buffered']
    #allocation6 [shape = 's32[1]{0}', space=sflag, size = 0x4, scoped, tag = 'scoped memory for tpu_custom_call.1']
    #allocation7 [shape = 'u8[65536]{0}', space=vmem, size = 0x10000, scoped, tag = 'output window, operand 0, single buffered']
    %12 = vsyncpa [#allocation3], 0
    %13 = vsyncpa [#allocation6], 0
    %14 = vsyncpa [#allocation4], 0
    // Predicated region
    $region2: #{tpu_custom_call.1} parent=1 // pred_check
      _
    $region3: #{tpu_custom_call.1} parent=1 // pred_check_branch
      %16 = sbr.rel (0) target = $region5
    $region4: #{tpu_custom_call.1} parent=1 // pred_region
      _
    $region5: #{tpu_custom_call.1} parent=1 // pred_fallthru
      _
    // Predicated region
    $region6: #{tpu_custom_call.1} parent=1 // pred_check
      _
    $region7: #{tpu_custom_call.1} parent=1 // pred_check_branch
      %18 = sbr.rel (0) target = $region9
    $region8: #{tpu_custom_call.1} parent=1 // pred_region
      %20 = vsyncadd [#allocation3], 0
      %s21 = sshll.u32 %s1, 4
      %s22 = int_to_ptr.hbm [resolvable:$true] %s21
      %s23 = sshll.u32 [#allocation2], 4
      %s24 = int_to_ptr.vmem [resolvable:$true] %s23
      %29 = dma.hbm_to_vmem [thread:$0]  %s22, 2048, %s24, [#allocation3], 128, 128, 8
    $region9: #{tpu_custom_call.1} parent=1 // pred_fallthru
      _
    // Predicated region
    $region10: #{tpu_custom_call.1} parent=1 // pred_check
      _
    $region11: #{tpu_custom_call.1} parent=1 // pred_check_branch
      %31 = sbr.rel (0) target = $region13
    $region12: #{tpu_custom_call.1} parent=1 // pred_region
      _
    $region13: #{tpu_custom_call.1} parent=1 // pred_fallthru
      _
    // Predicated region
    $region14: #{tpu_custom_call.1} parent=1 // pred_check
      _
    $region15: #{tpu_custom_call.1} parent=1 // pred_check_branch
      %33 = sbr.rel (0) target = $region17
    $region16: #{tpu_custom_call.1} parent=1 // pred_region
      %35 = vsyncadd [#allocation6], 0
      %s36 = sshll.u32 %s3, 4
      %s37 = int_to_ptr.hbm [resolvable:$true] %s36
      %s38 = sshll.u32 [#allocation5], 4
      %s39 = int_to_ptr.vmem [resolvable:$true] %s38
      %44 = dma.hbm_to_vmem [thread:$0]  %s37, 256, %s39, [#allocation6], 128, 128, 8
    $region17: #{tpu_custom_call.1} parent=1 // pred_fallthru
      _
    // Predicated region
    $region18: #{tpu_custom_call.1} parent=1 // pred_check
      _
    $region19: #{tpu_custom_call.1} parent=1 // pred_check_branch
      %46 = sbr.rel (0) target = $region21
    $region20: #{tpu_custom_call.1} parent=1 // pred_region
      _
    $region21: #{tpu_custom_call.1} parent=1 // pred_fallthru
      _
    // Predicated region
    $region22: #{tpu_custom_call.1} parent=1 // pred_check
      _
    $region23: #{tpu_custom_call.1} parent=1 // pred_check_branch
      %48 = sbr.rel (0) target = $region25
    $region24: #{tpu_custom_call.1} parent=1 // pred_region
      _
    $region25: #{tpu_custom_call.1} parent=1 // pred_fallthru
      _
    // Predicated region
    $region26: #{tpu_custom_call.1} parent=1 // pred_check
      _
    $region27: #{tpu_custom_call.1} parent=1 // pred_check_branch
      %50 = sbr.rel (0) target = $region29
    $region28: #{tpu_custom_call.1} parent=1 // pred_region
      _
    $region29: #{tpu_custom_call.1} parent=1 // pred_fallthru
      _
    // Predicated region
    $region30: #{tpu_custom_call.1} parent=1 // pred_check
      _
    $region31: #{tpu_custom_call.1} parent=1 // pred_check_branch
      %52 = sbr.rel (0) target = $region33
    $region32: #{tpu_custom_call.1} parent=1 // pred_region
      %54 = dma.done [#allocation3], 2048
    $region33: #{tpu_custom_call.1} parent=1 // pred_fallthru
      _
    // Predicated region
    $region34: #{tpu_custom_call.1} parent=1 // pred_check
      _
    $region35: #{tpu_custom_call.1} parent=1 // pred_check_branch
      %56 = sbr.rel (0) target = $region37
    $region36: #{tpu_custom_call.1} parent=1 // pred_region
      %58 = dma.done [#allocation6], 256
    $region37: #{tpu_custom_call.1} parent=1 // pred_fallthru
      _
    %v59 = vld [vmem:[%s2] sm:$0xff]
    %v60 = vld [vmem:[%s2 + $0x8] sm:$0xff]
    %v61 = vld [vmem:[#allocation5] sm:$0xff]
    %v62 = vld [vmem:[#allocation5 + $0x8] sm:$0xff]
    %v63 = vld [vmem:[%s4] sm:$0xff]
    %v64 = vld [vmem:[%s4 + $0x8] sm:$0xff]
    %v65 = vld [vmem:[%s5] sm:$0xff]
    %v66 = vld [vmem:[%s5 + $0x8] sm:$0xff]
    %v67 = vld [vmem:[%s5 + $0x10] sm:$0xff]
    %v68 = vld [vmem:[%s5 + $0x18] sm:$0xff]
    %v69 = vld [vmem:[%s5 + $0x20] sm:$0xff]
    %v70 = vld [vmem:[%s5 + $0x28] sm:$0xff]
    %v71 = vld [vmem:[%s5 + $0x30] sm:$0xff]
    %v72 = vld [vmem:[%s5 + $0x38] sm:$0xff]
    %v73 = vld [vmem:[%s6] sm:$0xff]
    %v74 = vld [vmem:[%s6 + $0x8] sm:$0xff]
    %v75 = vld [vmem:[%s6 + $0x10] sm:$0xff]
    %v76 = vld [vmem:[%s6 + $0x18] sm:$0xff]
    %v77 = vld [vmem:[%s6 + $0x20] sm:$0xff]
    %v78 = vld [vmem:[%s6 + $0x28] sm:$0xff]
    %v79 = vld [vmem:[%s6 + $0x30] sm:$0xff]
    %v80 = vld [vmem:[%s6 + $0x38] sm:$0xff]
    %v81 = vld [vmem:[%s0] sm:$0xff]
    %v82 = vld [vmem:[%s0 + $0x8] sm:$0xff]
    %v83 = vld [vmem:[%s0 + $0x10] sm:$0xff]
    %v84 = vld [vmem:[%s0 + $0x18] sm:$0xff]
    %v85 = vld [vmem:[%s0 + $0x20] sm:$0xff]
    %v86 = vld [vmem:[%s0 + $0x28] sm:$0xff]
    %v87 = vld [vmem:[%s0 + $0x30] sm:$0xff]
    %v88 = vld [vmem:[%s0 + $0x38] sm:$0xff]
    %v89 = vld [vmem:[#allocation2] sm:$0xff]
    %v90 = vld [vmem:[#allocation2 + $0x8] sm:$0xff]
    %v91 = vld [vmem:[#allocation2 + $0x10] sm:$0xff]
    %v92 = vld [vmem:[#allocation2 + $0x18] sm:$0xff]
    %v93 = vld [vmem:[#allocation2 + $0x20] sm:$0xff]
    %v94 = vld [vmem:[#allocation2 + $0x28] sm:$0xff]
    %v95 = vld [vmem:[#allocation2 + $0x30] sm:$0xff]
    %v96 = vld [vmem:[#allocation2 + $0x38] sm:$0xff]
    %vm97 = vcmask 523264
    %v99 = vsel %vm97, %v61, 0
    %v102 = vsel %vm97, %v62, 0
    %104 = vmatpush.msra.mxu0 0.0
    %105 = vmatpush.msra.mxu0 0.0
    %106 = vmatpush.msra.mxu0 0.0
    %107 = vmatpush.msra.mxu0 0.0
    %108 = vmatpush.msra.mxu0 0.0
    %109 = vmatpush.msra.mxu0 0.0
    %110 = vmatpush.msra.mxu0 0.0
    %111 = vmatpush.msra.mxu0 0.0
    %112 = vmatpush.msra.mxu0 %v96
    %113 = vmatpush.msra.mxu0 %v95
    %114 = vmatpush.msra.mxu0 %v94
    %115 = vmatpush.msra.mxu0 %v93
    %116 = vmatpush.msra.mxu0 %v92
    %117 = vmatpush.msra.mxu0 %v91
    %118 = vmatpush.msra.mxu0 %v90
    %119 = vmatpush.msra.mxu0 %v89
    %120 = vmatmul.f32.gmra.mxu0 %v99
    %v121 = vpop.f32.mrf.mxu0
    %v122 = vadd.f32 0.0, %v121
    %123 = vmatmul.f32.gmra.mxu0 %v102
    %v124 = vpop.f32.mrf.mxu0
    %v125 = vadd.f32 0.0, %v124
    %126 = vdwg.mxu0
    %v128 = vsel %vm97, %v59, 0
    %v131 = vsel %vm97, %v60, 0
    %133 = vmatpush.msra.mxu0 0.0
    %134 = vmatpush.msra.mxu0 0.0
    %135 = vmatpush.msra.mxu0 0.0
    %136 = vmatpush.msra.mxu0 0.0
    %137 = vmatpush.msra.mxu0 0.0
    %138 = vmatpush.msra.mxu0 0.0
    %139 = vmatpush.msra.mxu0 0.0
    %140 = vmatpush.msra.mxu0 0.0
    %141 = vmatpush.msra.mxu0 %v88
    %142 = vmatpush.msra.mxu0 %v87
    %143 = vmatpush.msra.mxu0 %v86
    %144 = vmatpush.msra.mxu0 %v85
    %145 = vmatpush.msra.mxu0 %v84
    %146 = vmatpush.msra.mxu0 %v83
    %147 = vmatpush.msra.mxu0 %v82
    %148 = vmatpush.msra.mxu0 %v81
    %149 = vmatmul.f32.gmra.mxu0 %v128
    %v150 = vpop.f32.mrf.mxu0
    %v151 = vadd.f32 %v122, %v150
    %152 = vmatmul.f32.gmra.mxu0 %v131
    %v153 = vpop.f32.mrf.mxu0
    %v154 = vadd.f32 %v125, %v153
    %155 = vdwg.mxu0
    %157 = vset.pattern.permute.xlu0 0
    %158 = vperm.xlu0 %157, %v63
    %v159 = vpop.permute.xlu0 %158
    %162 = vset.pattern.permute.xlu0 0
    %163 = vperm.xlu0 %162, %v64
    %v164 = vpop.permute.xlu0 %163
    %v166 = vadd.f32 %v151, %v159
    %v167 = vadd.f32 %v154, %v164
    %v168 = vxor.u32 %v166, 2147483648
    %v169 = vxor.u32 %v167, 2147483648
    %v170 = vmul.f32 %v168, 1.442695
    %v171 = vpow.pop %v170
    %v172 = vmul.f32 %v169, 1.442695
    %v173 = vpow.pop %v172
    %v174 = vadd.f32 %v171, 1.0
    %v175 = vadd.f32 %v173, 1.0
    %v176 = vrcp.pop %v174
    %v177 = vmul.f32 %v174, %v176
    %v178 = vsub.f32 1.0, %v177
    %v179 = vmul.f32 %v176, %v178
    %v180 = vadd.f32 %v176, %v179
    %vm181 = vweird.f32 %v174
    %vm182 = vweird.f32 %v176
    %vm183 = vmor %vm181, %vm182
    %v184 = vsel %vm183, %v176, %v180
    %v185 = vand.u32 2147483647, %v174
    %vm186 = vcmp.eq.f32.partialorder %v185, 8.507059e+37
    %v187 = vand.u32 %v174, 2147483648
    %v188 = vor.u32 1.1754944e-38, %v187
    %v189 = vsel %vm186, %v188, %v184
    %v190 = vmul.f32 1.0, %v189
    %v191 = vrcp.pop %v175
    %v192 = vmul.f32 %v175, %v191
    %v193 = vsub.f32 1.0, %v192
    %v194 = vmul.f32 %v191, %v193
    %v195 = vadd.f32 %v191, %v194
    %vm196 = vweird.f32 %v175
    %vm197 = vweird.f32 %v191
    %vm198 = vmor %vm196, %vm197
    %v199 = vsel %vm198, %v191, %v195
    %v200 = vand.u32 2147483647, %v175
    %vm201 = vcmp.eq.f32.partialorder %v200, 8.507059e+37
    %v202 = vand.u32 %v175, 2147483648
    %v203 = vor.u32 1.1754944e-38, %v202
    %v204 = vsel %vm201, %v203, %v199
    %v205 = vmul.f32 1.0, %v204
    %v206 = vmul.f32 %v166, %v190
    %v207 = vmul.f32 %v167, %v205
    %209 = vset.pattern.permute.xlu0 0
    %210 = vperm.xlu0 %209, %v73
    %v211 = vpop.permute.xlu0 %210
    %214 = vset.pattern.permute.xlu0 0
    %215 = vperm.xlu0 %214, %v74
    %v216 = vpop.permute.xlu0 %215
    %219 = vset.pattern.permute.xlu0 0
    %220 = vperm.xlu0 %219, %v75
    %v221 = vpop.permute.xlu0 %220
    %224 = vset.pattern.permute.xlu0 0
    %225 = vperm.xlu0 %224, %v76
    %v226 = vpop.permute.xlu0 %225
    %229 = vset.pattern.permute.xlu0 0
    %230 = vperm.xlu0 %229, %v77
    %v231 = vpop.permute.xlu0 %230
    %234 = vset.pattern.permute.xlu0 0
    %235 = vperm.xlu0 %234, %v78
    %v236 = vpop.permute.xlu0 %235
    %239 = vset.pattern.permute.xlu0 0
    %240 = vperm.xlu0 %239, %v79
    %v241 = vpop.permute.xlu0 %240
    %244 = vset.pattern.permute.xlu0 0
    %245 = vperm.xlu0 %244, %v80
    %v246 = vpop.permute.xlu0 %245
    %vm248 = vcmask 130048
    %v250 = vsel %vm248, %v65, 0
    %v253 = vsel %vm248, %v66, 0
    %v256 = vsel %vm248, %v67, 0
    %v259 = vsel %vm248, %v68, 0
    %v262 = vsel %vm248, %v69, 0
    %v265 = vsel %vm248, %v70, 0
    %v268 = vsel %vm248, %v71, 0
    %v271 = vsel %vm248, %v72, 0
    %273 = vmatpush.msra.mxu0 0.0
    %274 = vmatpush.msra.mxu0 0.0
    %275 = vmatpush.msra.mxu0 0.0
    %276 = vmatpush.msra.mxu0 0.0
    %277 = vmatpush.msra.mxu0 0.0
    %278 = vmatpush.msra.mxu0 0.0
    %279 = vmatpush.msra.mxu0 0.0
    %280 = vmatpush.msra.mxu0 0.0
    %281 = vmatpush.msra.mxu0 0.0
    %282 = vmatpush.msra.mxu0 0.0
    %283 = vmatpush.msra.mxu0 0.0
    %284 = vmatpush.msra.mxu0 0.0
    %285 = vmatpush.msra.mxu0 0.0
    %286 = vmatpush.msra.mxu0 0.0
    %287 = vmatpush.msra.mxu0 %v207
    %288 = vmatpush.msra.mxu0 %v206
    %289 = vmatmul.f32.gmra.mxu0 %v250
    %v290 = vpop.f32.mrf.mxu0
    %v291 = vadd.f32 %v211, %v290
    %292 = vmatmul.f32.gmra.mxu0 %v253
    %v293 = vpop.f32.mrf.mxu0
    %v294 = vadd.f32 %v216, %v293
    %295 = vmatmul.f32.gmra.mxu0 %v256
    %v296 = vpop.f32.mrf.mxu0
    %v297 = vadd.f32 %v221, %v296
    %298 = vmatmul.f32.gmra.mxu0 %v259
    %v299 = vpop.f32.mrf.mxu0
    %v300 = vadd.f32 %v226, %v299
    %301 = vmatmul.f32.gmra.mxu0 %v262
    %v302 = vpop.f32.mrf.mxu0
    %v303 = vadd.f32 %v231, %v302
    %304 = vmatmul.f32.gmra.mxu0 %v265
    %v305 = vpop.f32.mrf.mxu0
    %v306 = vadd.f32 %v236, %v305
    %307 = vmatmul.f32.gmra.mxu0 %v268
    %v308 = vpop.f32.mrf.mxu0
    %v309 = vadd.f32 %v241, %v308
    %310 = vmatmul.f32.gmra.mxu0 %v271
    %v311 = vpop.f32.mrf.mxu0
    %v312 = vadd.f32 %v246, %v311
    %313 = vdwg.mxu0
    %v314 = vtanh.pop %v291
    %v315 = vtanh.pop %v294
    %v316 = vtanh.pop %v297
    %v317 = vtanh.pop %v300
    %v318 = vtanh.pop %v303
    %v319 = vtanh.pop %v306
    %v320 = vtanh.pop %v309
    %v321 = vtanh.pop %v312
    %v322 = vadd.f32 %v314, 1.0
    %v323 = vadd.f32 %v315, 1.0
    %v324 = vadd.f32 %v316, 1.0
    %v325 = vadd.f32 %v317, 1.0
    %v326 = vadd.f32 %v318, 1.0
    %v327 = vadd.f32 %v319, 1.0
    %v328 = vadd.f32 %v320, 1.0
    %v329 = vadd.f32 %v321, 1.0
    %v330 = vmul.f32 %v89, 2.0
    %v331 = vmul.f32 %v90, 2.0
    %v332 = vmul.f32 %v91, 2.0
    %v333 = vmul.f32 %v92, 2.0
    %v334 = vmul.f32 %v93, 2.0
    %v335 = vmul.f32 %v94, 2.0
    %v336 = vmul.f32 %v95, 2.0
    %v337 = vmul.f32 %v96, 2.0
    %v338 = vsub.f32 %v81, %v89
    %v339 = vsub.f32 %v82, %v90
    %v340 = vsub.f32 %v83, %v91
    %v341 = vsub.f32 %v84, %v92
    %v342 = vsub.f32 %v85, %v93
    %v343 = vsub.f32 %v86, %v94
    %v344 = vsub.f32 %v87, %v95
    %v345 = vsub.f32 %v88, %v96
    %v346 = vmul.f32 %v338, %v322
    %v347 = vmul.f32 %v339, %v323
    %v348 = vmul.f32 %v340, %v324
    %v349 = vmul.f32 %v341, %v325
    %v350 = vmul.f32 %v342, %v326
    %v351 = vmul.f32 %v343, %v327
    %v352 = vmul.f32 %v344, %v328
    %v353 = vmul.f32 %v345, %v329
    %v354 = vadd.f32 %v330, %v346
    %v355 = vadd.f32 %v331, %v347
    %v356 = vadd.f32 %v332, %v348
    %v357 = vadd.f32 %v333, %v349
    %v358 = vadd.f32 %v334, %v350
    %v359 = vadd.f32 %v335, %v351
    %v360 = vadd.f32 %v336, %v352
    %v361 = vadd.f32 %v337, %v353
    %362 = vst.msk [vmem:[#allocation7] sm:$0xff] %vm97, %v354
    %363 = vst.msk [vmem:[#allocation7 + $0x8] sm:$0xff] %vm97, %v355
    %364 = vst.msk [vmem:[#allocation7 + $0x10] sm:$0xff] %vm97, %v356
    %365 = vst.msk [vmem:[#allocation7 + $0x18] sm:$0xff] %vm97, %v357
    %366 = vst.msk [vmem:[#allocation7 + $0x20] sm:$0xff] %vm97, %v358
    %367 = vst.msk [vmem:[#allocation7 + $0x28] sm:$0xff] %vm97, %v359
    %368 = vst.msk [vmem:[#allocation7 + $0x30] sm:$0xff] %vm97, %v360
    %369 = vst.msk [vmem:[#allocation7 + $0x38] sm:$0xff] %vm97, %v361
    %s370 = scalar_lea.vmem %s0, 64
    %v371 = vld [vmem:[%s370] sm:$0xff]
    %v372 = vld [vmem:[%s370 + $0x8] sm:$0xff]
    %v373 = vld [vmem:[%s370 + $0x10] sm:$0xff]
    %v374 = vld [vmem:[%s370 + $0x18] sm:$0xff]
    %v375 = vld [vmem:[%s370 + $0x20] sm:$0xff]
    %v376 = vld [vmem:[%s370 + $0x28] sm:$0xff]
    %v377 = vld [vmem:[%s370 + $0x30] sm:$0xff]
    %v378 = vld [vmem:[%s370 + $0x38] sm:$0xff]
    %s379 = scalar_lea.vmem [#allocation2], 64
    %v380 = vld [vmem:[%s379] sm:$0xff]
    %v381 = vld [vmem:[%s379 + $0x8] sm:$0xff]
    %v382 = vld [vmem:[%s379 + $0x10] sm:$0xff]
    %v383 = vld [vmem:[%s379 + $0x18] sm:$0xff]
    %v384 = vld [vmem:[%s379 + $0x20] sm:$0xff]
    %v385 = vld [vmem:[%s379 + $0x28] sm:$0xff]
    %v386 = vld [vmem:[%s379 + $0x30] sm:$0xff]
    %v387 = vld [vmem:[%s379 + $0x38] sm:$0xff]
    %388 = vmatpush.msra.mxu0 0.0
    %389 = vmatpush.msra.mxu0 0.0
    %390 = vmatpush.msra.mxu0 0.0
    %391 = vmatpush.msra.mxu0 0.0
    %392 = vmatpush.msra.mxu0 0.0
    %393 = vmatpush.msra.mxu0 0.0
    %394 = vmatpush.msra.mxu0 0.0
    %395 = vmatpush.msra.mxu0 0.0
    %396 = vmatpush.msra.mxu0 %v387
    %397 = vmatpush.msra.mxu0 %v386
    %398 = vmatpush.msra.mxu0 %v385
    %399 = vmatpush.msra.mxu0 %v384
    %400 = vmatpush.msra.mxu0 %v383
    %401 = vmatpush.msra.mxu0 %v382
    %402 = vmatpush.msra.mxu0 %v381
    %403 = vmatpush.msra.mxu0 %v380
    %404 = vmatmul.f32.gmra.mxu0 %v99
    %v405 = vpop.f32.mrf.mxu0
    %v406 = vadd.f32 0.0, %v405
    %407 = vmatmul.f32.gmra.mxu0 %v102
    %v408 = vpop.f32.mrf.mxu0
    %v409 = vadd.f32 0.0, %v408
    %410 = vdwg.mxu0
    %411 = vmatpush.msra.mxu0 0.0
    %412 = vmatpush.msra.mxu0 0.0
    %413 = vmatpush.msra.mxu0 0.0
    %414 = vmatpush.msra.mxu0 0.0
    %415 = vmatpush.msra.mxu0 0.0
    %416 = vmatpush.msra.mxu0 0.0
    %417 = vmatpush.msra.mxu0 0.0
    %418 = vmatpush.msra.mxu0 0.0
    %419 = vmatpush.msra.mxu0 %v378
    %420 = vmatpush.msra.mxu0 %v377
    %421 = vmatpush.msra.mxu0 %v376
    %422 = vmatpush.msra.mxu0 %v375
    %423 = vmatpush.msra.mxu0 %v374
    %424 = vmatpush.msra.mxu0 %v373
    %425 = vmatpush.msra.mxu0 %v372
    %426 = vmatpush.msra.mxu0 %v371
    %427 = vmatmul.f32.gmra.mxu0 %v128
    %v428 = vpop.f32.mrf.mxu0
    %v429 = vadd.f32 %v406, %v428
    %430 = vmatmul.f32.gmra.mxu0 %v131
    %v431 = vpop.f32.mrf.mxu0
    %v432 = vadd.f32 %v409, %v431
    %433 = vdwg.mxu0
    %v434 = vadd.f32 %v429, %v159
    %v435 = vadd.f32 %v432, %v164
    %v436 = vxor.u32 %v434, 2147483648
    %v437 = vxor.u32 %v435, 2147483648
    %v438 = vmul.f32 %v436, 1.442695
    %v439 = vpow.pop %v438
    %v440 = vmul.f32 %v437, 1.442695
    %v441 = vpow.pop %v440
    %v442 = vadd.f32 %v439, 1.0
    %v443 = vadd.f32 %v441, 1.0
    %v444 = vrcp.pop %v442
    %v445 = vmul.f32 %v442, %v444
    %v446 = vsub.f32 1.0, %v445
    %v447 = vmul.f32 %v444, %v446
    %v448 = vadd.f32 %v444, %v447
    %vm449 = vweird.f32 %v442
    %vm450 = vweird.f32 %v444
    %vm451 = vmor %vm449, %vm450
    %v452 = vsel %vm451, %v444, %v448
    %v453 = vand.u32 2147483647, %v442
    %vm454 = vcmp.eq.f32.partialorder %v453, 8.507059e+37
    %v455 = vand.u32 %v442, 2147483648
    %v456 = vor.u32 1.1754944e-38, %v455
    %v457 = vsel %vm454, %v456, %v452
    %v458 = vmul.f32 1.0, %v457
    %v459 = vrcp.pop %v443
    %v460 = vmul.f32 %v443, %v459
    %v461 = vsub.f32 1.0, %v460
    %v462 = vmul.f32 %v459, %v461
    %v463 = vadd.f32 %v459, %v462
    %vm464 = vweird.f32 %v443
    %vm465 = vweird.f32 %v459
    %vm466 = vmor %vm464, %vm465
    %v467 = vsel %vm466, %v459, %v463
    %v468 = vand.u32 2147483647, %v443
    %vm469 = vcmp.eq.f32.partialorder %v468, 8.507059e+37
    %v470 = vand.u32 %v443, 2147483648
    %v471 = vor.u32 1.1754944e-38, %v470
    %v472 = vsel %vm469, %v471, %v467
    %v473 = vmul.f32 1.0, %v472
    %v474 = vmul.f32 %v434, %v458
    %v475 = vmul.f32 %v435, %v473
    %476 = vmatpush.msra.mxu0 0.0
    %477 = vmatpush.msra.mxu0 0.0
    %478 = vmatpush.msra.mxu0 0.0
    %479 = vmatpush.msra.mxu0 0.0
    %480 = vmatpush.msra.mxu0 0.0
    %481 = vmatpush.msra.mxu0 0.0
    %482 = vmatpush.msra.mxu0 0.0
    %483 = vmatpush.msra.mxu0 0.0
    %484 = vmatpush.msra.mxu0 0.0
    %485 = vmatpush.msra.mxu0 0.0
    %486 = vmatpush.msra.mxu0 0.0
    %487 = vmatpush.msra.mxu0 0.0
    %488 = vmatpush.msra.mxu0 0.0
    %489 = vmatpush.msra.mxu0 0.0
    %490 = vmatpush.msra.mxu0 %v475
    %491 = vmatpush.msra.mxu0 %v474
    %492 = vmatmul.f32.gmra.mxu0 %v250
    %v493 = vpop.f32.mrf.mxu0
    %v494 = vadd.f32 %v211, %v493
    %495 = vmatmul.f32.gmra.mxu0 %v253
    %v496 = vpop.f32.mrf.mxu0
    %v497 = vadd.f32 %v216, %v496
    %498 = vmatmul.f32.gmra.mxu0 %v256
    %v499 = vpop.f32.mrf.mxu0
    %v500 = vadd.f32 %v221, %v499
    %501 = vmatmul.f32.gmra.mxu0 %v259
    %v502 = vpop.f32.mrf.mxu0
    %v503 = vadd.f32 %v226, %v502
    %504 = vmatmul.f32.gmra.mxu0 %v262
    %v505 = vpop.f32.mrf.mxu0
    %v506 = vadd.f32 %v231, %v505
    %507 = vmatmul.f32.gmra.mxu0 %v265
    %v508 = vpop.f32.mrf.mxu0
    %v509 = vadd.f32 %v236, %v508
    %510 = vmatmul.f32.gmra.mxu0 %v268
    %v511 = vpop.f32.mrf.mxu0
    %v512 = vadd.f32 %v241, %v511
    %513 = vmatmul.f32.gmra.mxu0 %v271
    %v514 = vpop.f32.mrf.mxu0
    %v515 = vadd.f32 %v246, %v514
    %516 = vdwg.mxu0
    %v517 = vtanh.pop %v494
    %v518 = vtanh.pop %v497
    %v519 = vtanh.pop %v500
    %v520 = vtanh.pop %v503
    %v521 = vtanh.pop %v506
    %v522 = vtanh.pop %v509
    %v523 = vtanh.pop %v512
    %v524 = vtanh.pop %v515
    %v525 = vadd.f32 %v517, 1.0
    %v526 = vadd.f32 %v518, 1.0
    %v527 = vadd.f32 %v519, 1.0
    %v528 = vadd.f32 %v520, 1.0
    %v529 = vadd.f32 %v521, 1.0
    %v530 = vadd.f32 %v522, 1.0
    %v531 = vadd.f32 %v523, 1.0
    %v532 = vadd.f32 %v524, 1.0
    %v533 = vmul.f32 %v380, 2.0
    %v534 = vmul.f32 %v381, 2.0
    %v535 = vmul.f32 %v382, 2.0
    %v536 = vmul.f32 %v383, 2.0
    %v537 = vmul.f32 %v384, 2.0
    %v538 = vmul.f32 %v385, 2.0
    %v539 = vmul.f32 %v386, 2.0
    %v540 = vmul.f32 %v387, 2.0
    %v541 = vsub.f32 %v371, %v380
    %v542 = vsub.f32 %v372, %v381
    %v543 = vsub.f32 %v373, %v382
    %v544 = vsub.f32 %v374, %v383
    %v545 = vsub.f32 %v375, %v384
    %v546 = vsub.f32 %v376, %v385
    %v547 = vsub.f32 %v377, %v386
    %v548 = vsub.f32 %v378, %v387
    %v549 = vmul.f32 %v541, %v525
    %v550 = vmul.f32 %v542, %v526
    %v551 = vmul.f32 %v543, %v527
    %v552 = vmul.f32 %v544, %v528
    %v553 = vmul.f32 %v545, %v529
    %v554 = vmul.f32 %v546, %v530
    %v555 = vmul.f32 %v547, %v531
    %v556 = vmul.f32 %v548, %v532
    %v557 = vadd.f32 %v533, %v549
    %v558 = vadd.f32 %v534, %v550
    %v559 = vadd.f32 %v535, %v551
    %v560 = vadd.f32 %v536, %v552
    %v561 = vadd.f32 %v537, %v553
    %v562 = vadd.f32 %v538, %v554
    %v563 = vadd.f32 %v539, %v555
    %v564 = vadd.f32 %v540, %v556
    %s565 = scalar_lea.vmem [#allocation7], 64
    %566 = vst.msk [vmem:[%s565] sm:$0xff] %vm97, %v557
    %567 = vst.msk [vmem:[%s565 + $0x8] sm:$0xff] %vm97, %v558
    %568 = vst.msk [vmem:[%s565 + $0x10] sm:$0xff] %vm97, %v559
    %569 = vst.msk [vmem:[%s565 + $0x18] sm:$0xff] %vm97, %v560
    %570 = vst.msk [vmem:[%s565 + $0x20] sm:$0xff] %vm97, %v561
    %571 = vst.msk [vmem:[%s565 + $0x28] sm:$0xff] %vm97, %v562
    %572 = vst.msk [vmem:[%s565 + $0x30] sm:$0xff] %vm97, %v563
    %573 = vst.msk [vmem:[%s565 + $0x38] sm:$0xff] %vm97, %v564
    // Predicated region
    $region38: #{tpu_custom_call.1} parent=1 // pred_check
      _
    $region39: #{tpu_custom_call.1} parent=1 // pred_check_branch
      %575 = sbr.rel (0) target = $region41
    $region40: #{tpu_custom_call.1} parent=1 // pred_region
      %577 = vsyncadd [#allocation4], 0
      %s578 = sshll.u32 [#allocation7], 4
      %s579 = int_to_ptr.vmem [resolvable:$true] %s578
      %s580 = sshll.u32 %s7, 4
      %s581 = int_to_ptr.hbm [resolvable:$true] %s580
      %586 = dma.vmem_to_hbm [thread:$0]  %s579, 2048, %s581, [#allocation4], 128, 128, 8
    $region41: #{tpu_custom_call.1} parent=1 // pred_fallthru
      _
    // Predicated region
    $region42: #{tpu_custom_call.1} parent=1 // pred_check
      _
    $region43: #{tpu_custom_call.1} parent=1 // pred_check_branch
      %588 = sbr.rel (0) target = $region45
    $region44: #{tpu_custom_call.1} parent=1 // pred_region
      %590 = dma.done [#allocation4], 2048
    $region45: #{tpu_custom_call.1} parent=1 // pred_fallthru
      _
    %591 = vsyncpa [#allocation3], 1
    %592 = vsyncpa [#allocation6], 1
    %593 = vsyncpa [#allocation4], 1

</llo_original>
